<compile_context>
chip_gen: v7x
topology: tpu7x:2x2x1
jax: 0.10.0
libtpu: 0.0.40
codegen_flags: <defaults>
</compile_context>

<pallas_src>
import functools

import jax
import jax.numpy as jnp
from jax import lax
from jax.experimental import pallas as pl
from jax.experimental.pallas import tpu as pltpu


def _xent_partial_kernel(logits_ref, label_ref, out_ref, *, num_classes,
                         hw_total, cols_per_tile, mask_tail):
    """Blocks: logits/label (C, S, 128); out (1, 128) per-tile partial sum."""
    j = pl.program_id(1)

    logits = logits_ref[...].astype(jnp.float32)   # (C, S, 128) f32 (VMEM cast)
    label = label_ref[...]                         # (C, S, 128) native dtype

    # target = first argmax of label along the class axis (axis 0), like torch.argmax.
    c_iota = lax.broadcasted_iota(jnp.int32, label.shape, 0)            # (C, S, 128)
    lbl_max = jnp.max(label, axis=0, keepdims=True)                     # (1, S, 128)
    masked_idx = jnp.where(label == lbl_max, c_iota, num_classes)       # (C, S, 128)
    first_idx = jnp.min(masked_idx, axis=0)                             # (S, 128)
    picked = jnp.sum(
        jnp.where(masked_idx == first_idx[None], logits, 0.0), axis=0)  # (S, 128)

    # numerically stable logsumexp along the class axis
    row_max = jnp.max(logits, axis=0)                                   # (S, 128)
    lse = row_max + jnp.log(jnp.sum(jnp.exp(logits - row_max[None]), axis=0))

    per_col = lse - picked                                              # (S, 128)
    # TODO(synk): for very large C, restructure the class reduction as an online
    # fori_loop (running max / sumexp / argmax) to bound VMEM intermediates.

    if not mask_tail:
        out_ref[...] = jnp.sum(per_col, axis=0, keepdims=True)
    else:
        last = pl.num_programs(1) - 1

        @pl.when(j != last)
        def _():
            out_ref[...] = jnp.sum(per_col, axis=0, keepdims=True)

        @pl.when(j == last)
        def _():
            # Zero the ragged / padded tail columns with a select (NaN/Inf safe).
            s = per_col.shape[0]
            s_iota = lax.broadcasted_iota(jnp.int32, (s, 128), 0)
            l_iota = lax.broadcasted_iota(jnp.int32, (s, 128), 1)
            col = j * cols_per_tile + s_iota * 128 + l_iota
            masked = jnp.where(col < hw_total, per_col, 0.0)
            out_ref[...] = jnp.sum(masked, axis=0, keepdims=True)


def _choose_s_tile(r, c, itemsize, n):
    """Rows of 128 lanes per block: multiple of 8 (or == r), ~4 MiB per input block."""
    target_bytes = 4 * 1024 * 1024           # per input, per pipeline buffer
    s_target = (target_bytes // (c * 128 * max(1, itemsize))) // 8 * 8
    s_target = max(8, min(s_target, 4096))
    if r <= s_target:
        s_tile = r                           # full-extent block: always legal, no pad
    else:
        s_tile = s_target                    # multiple of 8; last block ragged
    if n == 1 and r > 8:
        # Keep >= ~4 spatial tiles so both v7x TensorCores get work at batch 1.
        cap = ((pl.cdiv(r, 4) + 7) // 8) * 8
        s_tile = min(s_tile, cap)
    return s_tile


def _vmem_limit_bytes():
    try:
        cap = pltpu.get_tpu_info().vmem_capacity_bytes
    except Exception:
        cap = 64 * 1024 * 1024               # conservative guess (v7x physical)
    return min(48 * 1024 * 1024, int(cap) * 3 // 4)


def cross_entropy_with_logits(logits_nchw, label_nchw):
    """logits_nchw, label_nchw: (N, C, H, W). Returns scalar mean cross-entropy."""
    in_dtype = logits_nchw.dtype
    n, c, h, w = logits_nchw.shape
    hw = h * w

    # Free reshapes only — no transpose, no dtype upcast in HBM.
    logits = logits_nchw.reshape(n, c, hw)
    label = label_nchw.reshape(n, c, hw)

    itemsize = jnp.dtype(in_dtype).itemsize
    r = pl.cdiv(hw, 128)
    if hw % 128 != 0:
        # TODO(synk): lane-unaligned H*W still costs one HBM pad copy; a
        # sublane-layout fallback kernel could remove it entirely.
        pad = r * 128 - hw
        logits = jnp.pad(logits, ((0, 0), (0, 0), (0, pad)))
        label = jnp.pad(label, ((0, 0), (0, 0), (0, pad)))

    logits = logits.reshape(n, c, r, 128)
    label = label.reshape(n, c, r, 128)

    s_tile = _choose_s_tile(r, c, itemsize, n)
    num_tiles = pl.cdiv(r, s_tile)
    mask_tail = (num_tiles * s_tile * 128) != hw

    kernel = functools.partial(
        _xent_partial_kernel,
        num_classes=c,
        hw_total=hw,
        cols_per_tile=s_tile * 128,
        mask_tail=mask_tail,
    )

    cost = pl.CostEstimate(
        flops=6 * n * c * hw,
        transcendentals=n * hw * (c + 1),
        bytes_accessed=2 * n * c * hw * itemsize + n * num_tiles * 128 * 4,
    )

    partials = pl.pallas_call(
        kernel,
        out_shape=jax.ShapeDtypeStruct((n, num_tiles, 1, 128), jnp.float32),
        grid_spec=pltpu.PrefetchScalarGridSpec(
            num_scalar_prefetch=0,
            grid=(n, num_tiles),
            in_specs=[
                pl.BlockSpec((None, c, s_tile, 128), lambda b, j: (b, 0, j, 0)),
                pl.BlockSpec((None, c, s_tile, 128), lambda b, j: (b, 0, j, 0)),
            ],
            out_specs=pl.BlockSpec((None, None, 1, 128), lambda b, j: (b, j, 0, 0)),
        ),
        compiler_params=pltpu.CompilerParams(
            dimension_semantics=("parallel", "parallel"),
            vmem_limit_bytes=_vmem_limit_bytes(),
        ),
        cost_estimate=cost,
    )(logits, label)

    loss = jnp.sum(partials) / jnp.float32(n * hw)
    return loss.astype(in_dtype)


def _reference(logits_nchw, label_nchw):
    c = logits_nchw.shape[1]
    logits = jnp.transpose(logits_nchw, (0, 2, 3, 1)).reshape(-1, c).astype(jnp.float32)
    label = jnp.transpose(label_nchw, (0, 2, 3, 1)).reshape(-1, c).astype(jnp.float32)
    tgt = jnp.argmax(label, axis=1)
    lse = jax.scipy.special.logsumexp(logits, axis=1)
    picked = jnp.take_along_axis(logits, tgt[:, None], axis=1)[:, 0]
    return jnp.mean(lse - picked).astype(logits_nchw.dtype)


if __name__ == "__main__":
    key = jax.random.PRNGKey(0)
    k1, k2, k3, k4 = jax.random.split(key, 4)

    # Primary case (module-consistent small shape).
    N, C, H, W = 2, 4, 16, 16
    logits = jax.random.normal(k1, (N, C, H, W), dtype=jnp.float32)
    # float "one-hot-ish" labels (argmax over the channel dim, like the torch code)
    label = jax.random.uniform(k2, (N, C, H, W), dtype=jnp.float32)

    loss = cross_entropy_with_logits(logits, label)
    jax.block_until_ready(loss)
    ref = _reference(logits, label)
    assert jnp.allclose(loss, ref, atol=1e-5, rtol=1e-5), (loss, ref)

    # Secondary case exercising the ragged / masked tail path (H*W % 128 != 0).
    N2, C2, H2, W2 = 1, 3, 20, 20
    logits2 = jax.random.normal(k3, (N2, C2, H2, W2), dtype=jnp.float32)
    label2 = jax.random.uniform(k4, (N2, C2, H2, W2), dtype=jnp.float32)

    loss2 = cross_entropy_with_logits(logits2, label2)
    jax.block_until_ready(loss2)
    ref2 = _reference(logits2, label2)
    assert jnp.allclose(loss2, ref2, atol=1e-5, rtol=1e-5), (loss2, ref2)

    print("KERNEL_OK")
</pallas_src>

<mosaic_0001>
module attributes {stable_mosaic.version = 11 : i64} {
  func.func @_xent_partial_kernel(%arg0: i32, %arg1: i32, %arg2: memref<1x4x2x128xf32, #tpu.memory_space<vmem>>, %arg3: memref<1x4x2x128xf32, #tpu.memory_space<vmem>>, %arg4: memref<1x1x1x128xf32, #tpu.memory_space<vmem>>) attributes {dimension_semantics = [#tpu.dimension_semantics<parallel>, #tpu.dimension_semantics<parallel>], iteration_bounds = array<i64: 2, 1>, scalar_prefetch = 0 : i64, scratch_operands = 0 : i64, tpu.core_type = #tpu.core_type<tc>, window_params = [{transform_indices = @transform_0, window_bounds = array<i64: 1, 4, 2, 128>}, {transform_indices = @transform_1, window_bounds = array<i64: 1, 4, 2, 128>}, {transform_indices = @transform_2, window_bounds = array<i64: 1, 1, 1, 128>}]} {
    %c0 = arith.constant 0 : index
    %c0_0 = arith.constant 0 : index
    %c0_1 = arith.constant 0 : index
    %c0_2 = arith.constant 0 : index
    %0 = vector.load %arg2[%c0, %c0_0, %c0_1, %c0_2] : memref<1x4x2x128xf32, #tpu.memory_space<vmem>>, vector<1x4x2x128xf32>
    %1 = vector.shape_cast %0 : vector<1x4x2x128xf32> to vector<4x2x128xf32>
    %c0_3 = arith.constant 0 : index
    %c0_4 = arith.constant 0 : index
    %c0_5 = arith.constant 0 : index
    %c0_6 = arith.constant 0 : index
    %2 = vector.load %arg3[%c0_3, %c0_4, %c0_5, %c0_6] : memref<1x4x2x128xf32, #tpu.memory_space<vmem>>, vector<1x4x2x128xf32>
    %3 = vector.shape_cast %2 : vector<1x4x2x128xf32> to vector<4x2x128xf32>
    %4 = tpu.iota {dimensions = array<i32: 0>} : vector<4x2x128xi32>
    %cst = arith.constant dense<0xFF800000> : vector<2x128xf32>
    %5 = vector.multi_reduction <maximumf>, %3, %cst [0] : vector<4x2x128xf32> to vector<2x128xf32>
    %6 = vector.shape_cast %5 : vector<2x128xf32> to vector<1x2x128xf32>
    %7 = vector.broadcast %6 : vector<1x2x128xf32> to vector<4x2x128xf32>
    %8 = arith.cmpf oeq, %3, %7 : vector<4x2x128xf32>
    %c4_i32 = arith.constant 4 : i32
    %9 = vector.broadcast %c4_i32 : i32 to vector<4x2x128xi32>
    %10 = arith.select %8, %4, %9 : vector<4x2x128xi1>, vector<4x2x128xi32>
    %cst_7 = arith.constant dense<2147483647> : vector<2x128xi32>
    %11 = vector.multi_reduction <minsi>, %10, %cst_7 [0] : vector<4x2x128xi32> to vector<2x128xi32>
    %12 = vector.shape_cast %11 : vector<2x128xi32> to vector<1x2x128xi32>
    %13 = vector.broadcast %12 : vector<1x2x128xi32> to vector<4x2x128xi32>
    %14 = arith.cmpi eq, %10, %13 : vector<4x2x128xi32>
    %cst_8 = arith.constant 0.000000e+00 : f32
    %15 = vector.broadcast %cst_8 : f32 to vector<4x2x128xf32>
    %16 = arith.select %14, %1, %15 : vector<4x2x128xi1>, vector<4x2x128xf32>
    %cst_9 = arith.constant dense<0.000000e+00> : vector<2x128xf32>
    %17 = vector.multi_reduction <add>, %16, %cst_9 [0] : vector<4x2x128xf32> to vector<2x128xf32>
    %cst_10 = arith.constant dense<0xFF800000> : vector<2x128xf32>
    %18 = vector.multi_reduction <maximumf>, %1, %cst_10 [0] : vector<4x2x128xf32> to vector<2x128xf32>
    %19 = vector.shape_cast %18 : vector<2x128xf32> to vector<1x2x128xf32>
    %20 = vector.broadcast %19 : vector<1x2x128xf32> to vector<4x2x128xf32>
    %21 = arith.subf %1, %20 : vector<4x2x128xf32>
    %22 = math.exp %21 : vector<4x2x128xf32>
    %cst_11 = arith.constant dense<0.000000e+00> : vector<2x128xf32>
    %23 = vector.multi_reduction <add>, %22, %cst_11 [0] : vector<4x2x128xf32> to vector<2x128xf32>
    %24 = math.log %23 : vector<2x128xf32>
    %25 = arith.addf %18, %24 : vector<2x128xf32>
    %26 = arith.subf %25, %17 : vector<2x128xf32>
    %cst_12 = arith.constant dense<0.000000e+00> : vector<128xf32>
    %27 = vector.multi_reduction <add>, %26, %cst_12 [0] : vector<2x128xf32> to vector<128xf32>
    %28 = vector.shape_cast %27 : vector<128xf32> to vector<1x128xf32>
    %c0_13 = arith.constant 0 : index
    %c0_14 = arith.constant 0 : index
    %c0_15 = arith.constant 0 : index
    %c0_16 = arith.constant 0 : index
    %29 = vector.load %arg4[%c0_13, %c0_14, %c0_15, %c0_16] : memref<1x1x1x128xf32, #tpu.memory_space<vmem>>, vector<1x1x1x128xf32>
    %30 = vector.shape_cast %29 : vector<1x1x1x128xf32> to vector<1x128xf32>
    %31 = vector.shape_cast %28 : vector<1x128xf32> to vector<1x1x1x128xf32>
    tpu.vector_store %arg4[%c0_13, %c0_14, %c0_15, %c0_16], %31 {strides = array<i32>} : memref<1x1x1x128xf32, #tpu.memory_space<vmem>>, vector<1x1x1x128xf32>,
    return
  }
  func.func @transform_0(%arg0: i32, %arg1: i32) -> (i32, i32, i32, i32) {
    %c0_i32 = arith.constant 0 : i32
    %c0_i32_0 = arith.constant 0 : i32
    %c0_i32_1 = arith.constant 0 : i32
    return %arg0, %c0_i32, %arg1, %c0_i32_0 : i32, i32, i32, i32
  }
  func.func @transform_1(%arg0: i32, %arg1: i32) -> (i32, i32, i32, i32) {
    %c0_i32 = arith.constant 0 : i32
    %c0_i32_0 = arith.constant 0 : i32
    %c0_i32_1 = arith.constant 0 : i32
    return %arg0, %c0_i32, %arg1, %c0_i32_0 : i32, i32, i32, i32
  }
  func.func @transform_2(%arg0: i32, %arg1: i32) -> (i32, i32, i32, i32) {
    %c0_i32 = arith.constant 0 : i32
    %c0_i32_0 = arith.constant 0 : i32
    %c0_i32_1 = arith.constant 0 : i32
    return %arg0, %arg1, %c0_i32, %c0_i32_0 : i32, i32, i32, i32
  }
}

</mosaic_0001>

<llo_original>
// kernel: tpu_custom_call.1
$region0: #{tpu_custom_call.1}
  #allocation0 [shape = 'u32[]', space=smem, size = 0x4, offset = 0x4, fixed_abs, tag = 'smem constant byte address 0x4 - core index']
  #allocation1 [shape = 'u32[144,128]{1,0:T(1,128)}', space=vmem, size = 0x12000, scoped, tag = 'internal scratch']
  %s0 = inlined_call_operand.hbm [shape: f32[2,4,2,128], index: 0, kind: input, shape index: {}]
  %s1 = inlined_call_operand.hbm [shape: f32[2,4,2,128], index: 1, kind: input, shape index: {}]
  %s2 = inlined_call_operand.hbm [shape: f32[2,1,1,128], index: 2, kind: output, shape index: {}]
  %s3 = sld [smem:[#allocation0]]
  $region49: #{tpu_custom_call.1} parent=0
    _
  %s5 = ssub.s32 1, %s3
  %s6 = scalar_select 0, %s5, %s3
  $region1: #{tpu_custom_call.1} parent=0
    #allocation2 [shape = 'u8[8192]{0}', space=vmem, size = 0x2000, scoped, tag = 'input window, operand 0']
    #allocation3 [shape = 's32[2]{0}', space=sflag, size = 0x8, scoped, tag = 'scoped memory for tpu_custom_call.1']
    #allocation4 [shape = 's32[2]{0}', space=sflag, size = 0x8, scoped, tag = 'scoped memory for tpu_custom_call.1']
    #allocation5 [shape = 'u8[8192]{0}', space=vmem, size = 0x2000, scoped, tag = 'input window, operand 1']
    #allocation6 [shape = 's32[2]{0}', space=sflag, size = 0x8, scoped, tag = 'scoped memory for tpu_custom_call.1']
    #allocation7 [shape = 'u8[1024]{0}', space=vmem, size = 0x400, scoped, tag = 'output window, operand 0']
    %7 = vsyncpa [#allocation3], 0
    %s8 = scalar_lea.sflag [#allocation3], 1
    %9 = vsyncpa %s8, 0
    %10 = vsyncpa [#allocation6], 0
    %s11 = scalar_lea.sflag [#allocation6], 1
    %12 = vsyncpa %s11, 0
    %13 = vsyncpa [#allocation4], 0
    %s14 = scalar_lea.sflag [#allocation4], 1
    %15 = vsyncpa %s14, 0
    loop: start=0, step=1, limit=4
    $region2: #{tpu_custom_call.1} parent=1 // loop_pre_header
      _
    $region3: #{tpu_custom_call.1} parent=1 // loop_header
      %s17 = sphi 0, %s21
      %p18 = scmp.ge.s32.totalorder %s17, 4
      %s24 = sphi 0, %s36
      %s25 = sphi 0, %s32
      %s26 = sphi 0, %s24
      %s27 = sphi 0, %s25
      %s28 = sphi 0, %s26
      %s29 = sphi 0, %s27
      %s41 = sphi 0, %s43
      %s44 = sphi 0, %s41
      %s45 = sphi 0, %s44
      %s61 = sphi 0, %s45
      %s69 = sphi 0, %s71
      %s72 = sphi 0, %s69
      %s73 = sphi 0, %s72
      %s89 = sphi 0, %s73
      %s97 = sphi 0, %s99
      %s100 = sphi 0, %s97
      %s101 = sphi 0, %s100
      %s117 = sphi 0, %s101
    $region4: #{tpu_custom_call.1} parent=1 // loop_header_branch
      %20 = sbr.rel (%p18) target = $region8
    $region5: #{tpu_custom_call.1} parent=1 // loop_body
      %s22 = ssub.s32 %s17, 1
      %s23 = ssub.s32 %s17, 2
      %s30 = sadd.s32 1, %s25
      %p31 = scmp.ge.s32.totalorder %s30, 1
      %s32 = scalar_select %p31, 0, %s30
      %s33 = sadd.s32 1, %s24
      %s34 = scalar_select %p31, %s33, %s24
      %p35 = scmp.ge.s32.totalorder %s34, 2
      %s36 = scalar_select %p35, 0, %s34
      %s37 = ssub.s32 %s24, %s36
      %s38 = ssub.s32 %s25, %s32
      %s39 = sor.u32 %s37, %s38
      %p40 = scmp.eq.s32.totalorder %s39, 0
      %s42 = sadd.s32 %s41, 1
      %s43 = scalar_select %p40, %s41, %s42
      %p46 = pneg %p40
      %p47 = scmp.eq.s32.totalorder %s17, 1
      %p48 = por %p46, %p47
      %p49 = scmp.ne.s32.totalorder %s41, %s44
      %p50 = scmp.eq.s32.totalorder %s17, 0
      %p51 = por %p49, %p50
      %p52 = scmp.ne.s32.totalorder %s41, %s44
      %p53 = scmp.eq.s32.totalorder %s22, 1
      %p54 = por %p52, %p53
      %p55 = scmp.ne.s32.totalorder %s44, %s45
      %p56 = scmp.eq.s32.totalorder %s22, 0
      %p57 = por %p55, %p56
      %p58 = scmp.ne.s32.totalorder %s44, %s45
      %p59 = scmp.eq.s32.totalorder %s23, 1
      %p60 = por %p58, %p59
      %p62 = scmp.ne.s32.totalorder %s45, %s61
      %p63 = scmp.eq.s32.totalorder %s23, 0
      %p64 = por %p62, %p63
      %s65 = ssub.s32 %s24, %s36
      %s66 = ssub.s32 %s25, %s32
      %s67 = sor.u32 %s65, %s66
      %p68 = scmp.eq.s32.totalorder %s67, 0
      %s70 = sadd.s32 %s69, 1
      %s71 = scalar_select %p68, %s69, %s70
      %p74 = pneg %p68
      %p75 = scmp.eq.s32.totalorder %s17, 1
      %p76 = por %p74, %p75
      %p77 = scmp.ne.s32.totalorder %s69, %s72
      %p78 = scmp.eq.s32.totalorder %s17, 0
      %p79 = por %p77, %p78
      %p80 = scmp.ne.s32.totalorder %s69, %s72
      %p81 = scmp.eq.s32.totalorder %s22, 1
      %p82 = por %p80, %p81
      %p83 = scmp.ne.s32.totalorder %s72, %s73
      %p84 = scmp.eq.s32.totalorder %s22, 0
      %p85 = por %p83, %p84
      %p86 = scmp.ne.s32.totalorder %s72, %s73
      %p87 = scmp.eq.s32.totalorder %s23, 1
      %p88 = por %p86, %p87
      %p90 = scmp.ne.s32.totalorder %s73, %s89
      %p91 = scmp.eq.s32.totalorder %s23, 0
      %p92 = por %p90, %p91
      %s93 = ssub.s32 %s24, %s36
      %s94 = ssub.s32 %s25, %s32
      %s95 = sor.u32 %s93, %s94
      %p96 = scmp.eq.s32.totalorder %s95, 0
      %s98 = sadd.s32 %s97, 1
      %s99 = scalar_select %p96, %s97, %s98
      %p102 = pneg %p96
      %p103 = scmp.eq.s32.totalorder %s17, 1
      %p104 = por %p102, %p103
      %p105 = scmp.ne.s32.totalorder %s97, %s100
      %p106 = scmp.eq.s32.totalorder %s17, 0
      %p107 = por %p105, %p106
      %p108 = scmp.ne.s32.totalorder %s97, %s100
      %p109 = scmp.eq.s32.totalorder %s22, 1
      %p110 = por %p108, %p109
      %p111 = scmp.ne.s32.totalorder %s100, %s101
      %p112 = scmp.eq.s32.totalorder %s22, 0
      %p113 = por %p111, %p112
      %p114 = scmp.ne.s32.totalorder %s100, %s101
      %p115 = scmp.eq.s32.totalorder %s23, 1
      %p116 = por %p114, %p115
      %p118 = scmp.ne.s32.totalorder %s101, %s117
      %p119 = scmp.eq.s32.totalorder %s23, 0
      %p120 = por %p118, %p119
      %p121 = scmp.le.s32.totalorder 1, %s17
      %p122 = scmp.lt.s32.totalorder %s17, 3
      %p123 = pnand %p121, %p122
      %p124 = pneg %p123
      // Predicated region
      $region9: #{tpu_custom_call.1} parent=5 // pred_check
        _
      $region10: #{tpu_custom_call.1} parent=5 // pred_check_branch
        %126 = sbr.rel (%p123) target = $region12
      $region11: #{tpu_custom_call.1} parent=5 // pred_region
        %s127 = ssub.s32 %s17, 1
      $region12: #{tpu_custom_call.1} parent=5 // pred_fallthru
        _
      %p128 = scmp.lt.s32.totalorder %s17, 2
      // Predicated region
      $region13: #{tpu_custom_call.1} parent=5 // pred_check
        %p129 = pneg %p128
      $region14: #{tpu_custom_call.1} parent=5 // pred_check_branch
        %131 = sbr.rel (%p129) target = $region16
      $region15: #{tpu_custom_call.1} parent=5 // pred_region
        // Predicated region
        $region17: #{tpu_custom_call.1} parent=15 // pred_check
          %p132 = pneg %p51
        $region18: #{tpu_custom_call.1} parent=15 // pred_check_branch
          %134 = sbr.rel (%p132) target = $region20
        $region19: #{tpu_custom_call.1} parent=15 // pred_region
          %s135 = sand.u32 %s41, 1
          %s136 = scalar_lea.sflag [#allocation3], %s135
          %s137 = sand.u32 %s41, 1
          %s138 = smul.addr %s137, 8
          %s139 = scalar_lea.vmem [#allocation2], %s138
          %s141 = ssub.s32 128, 128
          %142 = vsyncadd %s136, %s141
          %s143 = smul.addr %s24, 4
          %s144 = sadd.s32 %s25, %s143
          %s145 = smul.addr %s144, 32
          %s146 = scalar_lea.hbm %s0, %s145
          %s147 = sshll.u32 %s139, 4
          %s148 = int_to_ptr.vmem [resolvable:$true] %s147
          %153 = dma.hbm_to_vmem [thread:$0]  %s146, 128, %s148, %s136, 32, 32, 2
        $region20: #{tpu_custom_call.1} parent=15 // pred_fallthru
          _
        // Predicated region
        $region21: #{tpu_custom_call.1} parent=15 // pred_check
          %p154 = pneg %p79
        $region22: #{tpu_custom_call.1} parent=15 // pred_check_branch
          %156 = sbr.rel (%p154) target = $region24
        $region23: #{tpu_custom_call.1} parent=15 // pred_region
          %s157 = sand.u32 %s69, 1
          %s158 = scalar_lea.sflag [#allocation6], %s157
          %s159 = sand.u32 %s69, 1
          %s160 = smul.addr %s159, 8
          %s161 = scalar_lea.vmem [#allocation5], %s160
          %s163 = ssub.s32 128, 128
          %164 = vsyncadd %s158, %s163
          %s165 = smul.addr %s24, 4
          %s166 = sadd.s32 %s25, %s165
          %s167 = smul.addr %s166, 32
          %s168 = scalar_lea.hbm %s1, %s167
          %s169 = sshll.u32 %s161, 4
          %s170 = int_to_ptr.vmem [resolvable:$true] %s169
          %175 = dma.hbm_to_vmem [thread:$0]  %s168, 128, %s170, %s158, 32, 32, 2
        $region24: #{tpu_custom_call.1} parent=15 // pred_fallthru
          _
      $region16: #{tpu_custom_call.1} parent=5 // pred_fallthru
        _
      %p176 = scmp.le.s32.totalorder 1, %s17
      %p177 = scmp.lt.s32.totalorder %s17, 3
      %p178 = pnand %p176, %p177
      %p179 = pneg %p178
      // Predicated region
      $region25: #{tpu_custom_call.1} parent=5 // pred_check
        _
      $region26: #{tpu_custom_call.1} parent=5 // pred_check_branch
        %181 = sbr.rel (%p178) target = $region28
      $region27: #{tpu_custom_call.1} parent=5 // pred_region
        %s182 = ssub.s32 %s17, 1
        %s183 = sand.u32 %s44, 1
        %s184 = scalar_lea.sflag [#allocation3], %s183
        %s185 = sand.u32 %s44, 1
        %s186 = smul.addr %s185, 8
        %s187 = scalar_lea.vmem [#allocation2], %s186
        // Predicated region
        $region29: #{tpu_custom_call.1} parent=27 // pred_check
          %p188 = pneg %p57
        $region30: #{tpu_custom_call.1} parent=27 // pred_check_branch
          %190 = sbr.rel (%p188) target = $region32
        $region31: #{tpu_custom_call.1} parent=27 // pred_region
          %191 = dma.done %s184, 128
        $region32: #{tpu_custom_call.1} parent=27 // pred_fallthru
          _
        %s192 = sand.u32 %s72, 1
        %s193 = scalar_lea.sflag [#allocation6], %s192
        %s194 = sand.u32 %s72, 1
        %s195 = smul.addr %s194, 8
        %s196 = scalar_lea.vmem [#allocation5], %s195
        // Predicated region
        $region33: #{tpu_custom_call.1} parent=27 // pred_check
          %p197 = pneg %p85
        $region34: #{tpu_custom_call.1} parent=27 // pred_check_branch
          %199 = sbr.rel (%p197) target = $region36
        $region35: #{tpu_custom_call.1} parent=27 // pred_region
          %200 = dma.done %s193, 128
        $region36: #{tpu_custom_call.1} parent=27 // pred_fallthru
          _
        %s201 = sand.u32 %s44, 1
        %s202 = scalar_lea.sflag [#allocation3], %s201
        %s203 = sand.u32 %s44, 1
        %s204 = smul.addr %s203, 8
        %s205 = scalar_lea.vmem [#allocation2], %s204
        %p206 = pneg %p57
        %p207 = pneg %p54
        %s208 = sand.u32 %s72, 1
        %s209 = scalar_lea.sflag [#allocation6], %s208
        %s210 = sand.u32 %s72, 1
        %s211 = smul.addr %s210, 8
        %s212 = scalar_lea.vmem [#allocation5], %s211
        %p213 = pneg %p85
        %p214 = pneg %p82
        %p215 = pneg %p113
        %p216 = pneg %p110
        %s217 = sand.u32 %s100, 1
        %s218 = scalar_lea.sflag [#allocation4], %s217
        %s219 = sand.u32 %s100, 1
        %s220 = scalar_lea.vmem [#allocation7], %s219
        %v221 = vld [vmem:[%s187] sm:$0x3]
        %v222 = vld [vmem:[%s187 + $0x2] sm:$0x3]
        %v223 = vld [vmem:[%s187 + $0x4] sm:$0x3]
        %v224 = vld [vmem:[%s187 + $0x6] sm:$0x3]
        %v225 = vld [vmem:[%s196] sm:$0x3]
        %v226 = vld [vmem:[%s196 + $0x2] sm:$0x3]
        %v227 = vld [vmem:[%s196 + $0x4] sm:$0x3]
        %v228 = vld [vmem:[%s196 + $0x6] sm:$0x3]
        %vm229 = vcmask 1041408
        %v230 = vsel %vm229, %v225, -inf
        %v231 = vsel %vm229, %v226, -inf
        %v232 = vsel %vm229, %v227, -inf
        %v233 = vsel %vm229, %v228, -inf
        %v234 = vmax.f32 %v230, %v231
        %v235 = vmax.f32 %v232, %v233
        %v236 = vmax.f32 %v234, %v235
        %vm237 = vcmp.eq.f32.partialorder %v225, %v236
        %vm238 = vcmp.eq.f32.partialorder %v226, %v236
        %vm239 = vcmp.eq.f32.partialorder %v227, %v236
        %vm240 = vcmp.eq.f32.partialorder %v228, %v236
        %v241 = vsel %vm237, 0, 4
        %v242 = vsel %vm238, 1, 4
        %v243 = vsel %vm239, 2, 4
        %v244 = vsel %vm240, 3, 4
        %v245 = vsel %vm229, %v241, 2147483647
        %v246 = vsel %vm229, %v242, 2147483647
        %v247 = vsel %vm229, %v243, 2147483647
        %v248 = vsel %vm229, %v244, 2147483647
        %vm249 = vcmp.lt.s32.totalorder %v245, %v246
        %v250 = vsel %vm249, %v245, %v246
        %vm251 = vcmp.lt.s32.totalorder %v247, %v248
        %v252 = vsel %vm251, %v247, %v248
        %vm253 = vcmp.lt.s32.totalorder %v250, %v252
        %v254 = vsel %vm253, %v250, %v252
        %vm255 = vcmp.eq.s32.totalorder %v241, %v254
        %vm256 = vcmp.eq.s32.totalorder %v242, %v254
        %vm257 = vcmp.eq.s32.totalorder %v243, %v254
        %vm258 = vcmp.eq.s32.totalorder %v244, %v254
        %v259 = vsel %vm255, %v221, 0.0
        %v260 = vsel %vm256, %v222, 0.0
        %v261 = vsel %vm257, %v223, 0.0
        %v262 = vsel %vm258, %v224, 0.0
        %v263 = vsel %vm229, %v259, 0.0
        %v264 = vsel %vm229, %v260, 0.0
        %v265 = vadd.f32 %v263, %v264
        %v266 = vsel %vm229, %v261, 0.0
        %v267 = vadd.f32 %v265, %v266
        %v268 = vsel %vm229, %v262, 0.0
        %v269 = vadd.f32 %v267, %v268
        %v270 = vsel %vm229, %v221, -inf
        %v271 = vsel %vm229, %v222, -inf
        %v272 = vsel %vm229, %v223, -inf
        %v273 = vsel %vm229, %v224, -inf
        %v274 = vmax.f32 %v270, %v271
        %v275 = vmax.f32 %v272, %v273
        %v276 = vmax.f32 %v274, %v275
        %v277 = vsub.f32 %v221, %v276
        %v278 = vsub.f32 %v222, %v276
        %v279 = vsub.f32 %v223, %v276
        %v280 = vsub.f32 %v224, %v276
        %v281 = vmul.f32 %v277, 1.442695
        %v282 = vpow.pop %v281
        %v283 = vmul.f32 %v278, 1.442695
        %v284 = vpow.pop %v283
        %v285 = vmul.f32 %v279, 1.442695
        %v286 = vpow.pop %v285
        %v287 = vmul.f32 %v280, 1.442695
        %v288 = vpow.pop %v287
        %v289 = vsel %vm229, %v282, 0.0
        %v290 = vsel %vm229, %v284, 0.0
        %v291 = vadd.f32 %v289, %v290
        %v292 = vsel %vm229, %v286, 0.0
        %v293 = vadd.f32 %v291, %v292
        %v294 = vsel %vm229, %v288, 0.0
        %v295 = vadd.f32 %v293, %v294
        %v296 = vlog2.pop %v295
        %v297 = vmul.f32 %v296, 0.6931472
        %v298 = vadd.f32 %v276, %v297
        %v299 = vsub.f32 %v298, %v269
        %v300 = vsel %vm229, %v299, 0.0
        %v301 = vrot.slane %v300, 4
        %v302 = vadd.f32 %v300, %v301
        %v303 = vrot.slane %v302, 2
        %v304 = vadd.f32 %v302, %v303
        %v305 = vrot.slane %v304, 1
        %v306 = vadd.f32 %v304, %v305
        %307 = vst [vmem:[%s220] sm:$0x1] %v306
        %s308 = sand.u32 %s100, 1
        %s309 = scalar_lea.sflag [#allocation4], %s308
        %s310 = sand.u32 %s100, 1
        %s311 = scalar_lea.vmem [#allocation7], %s310
        // Predicated region
        $region37: #{tpu_custom_call.1} parent=27 // pred_check
          %p312 = pneg %p110
        $region38: #{tpu_custom_call.1} parent=27 // pred_check_branch
          %314 = sbr.rel (%p312) target = $region40
        $region39: #{tpu_custom_call.1} parent=27 // pred_region
          %s316 = ssub.s32 16, 16
          %317 = vsyncadd %s309, %s316
          %s318 = sadd.s32 %s27, %s26
          %s319 = smul.addr %s318, 16
          %s320 = scalar_lea.hbm %s2, %s319
          %s322 = sshll.u32 %s311, 4
          %s323 = int_to_ptr.vmem [resolvable:$true] %s322
          %325 = dma.vmem_to_hbm [thread:$0]  %s323, 16, %s320, %s309
        $region40: #{tpu_custom_call.1} parent=27 // pred_fallthru
          _
      $region28: #{tpu_custom_call.1} parent=5 // pred_fallthru
        _
      %p326 = scmp.le.s32.totalorder 2, %s17
      // Predicated region
      $region41: #{tpu_custom_call.1} parent=5 // pred_check
        %p327 = pneg %p326
      $region42: #{tpu_custom_call.1} parent=5 // pred_check_branch
        %329 = sbr.rel (%p327) target = $region44
      $region43: #{tpu_custom_call.1} parent=5 // pred_region
        %s330 = ssub.s32 %s17, 2
        // Predicated region
        $region45: #{tpu_custom_call.1} parent=43 // pred_check
          %p331 = pneg %p116
        $region46: #{tpu_custom_call.1} parent=43 // pred_check_branch
          %333 = sbr.rel (%p331) target = $region48
        $region47: #{tpu_custom_call.1} parent=43 // pred_region
          %s334 = sand.u32 %s101, 1
          %s335 = scalar_lea.sflag [#allocation4], %s334
          %s336 = sand.u32 %s101, 1
          %s337 = scalar_lea.vmem [#allocation7], %s336
          %338 = dma.done %s335, 16
        $region48: #{tpu_custom_call.1} parent=43 // pred_fallthru
          _
      $region44: #{tpu_custom_call.1} parent=5 // pred_fallthru
        _
    $region6: #{tpu_custom_call.1} parent=1 // loop_footer
      %s21 = sadd.s32 1, %s17
    $region7: #{tpu_custom_call.1} parent=1 // loop_footer_branch
      %16 = sbr.rel target = $region3
    $region8: #{tpu_custom_call.1} parent=1 // loop_exit
      _
    %339 = vsyncpa [#allocation3], 1
    %s340 = scalar_lea.sflag [#allocation3], 1
    %341 = vsyncpa %s340, 1
    %342 = vsyncpa [#allocation6], 1
    %s343 = scalar_lea.sflag [#allocation6], 1
    %344 = vsyncpa %s343, 1
    %345 = vsyncpa [#allocation4], 1
    %s346 = scalar_lea.sflag [#allocation4], 1
    %347 = vsyncpa %s346, 1

</llo_original>
